<compile_context>
chip_gen: v6e
topology: v6e:2x2x1
jax: 0.10.0
libtpu: 0.0.40
codegen_flags: <defaults>
</compile_context>

<pallas_src>
import math
import functools

import jax
import jax.numpy as jnp
from jax import lax
from jax.experimental import pallas as pl
from jax.experimental.pallas import tpu as pltpu


def _round_up(x: int, m: int) -> int:
    return (x + m - 1) // m * m


def _vmem_limit_bytes() -> int:
    """Per-core scoped VMEM limit: ~3/4 of physical, capped at 100 MiB."""
    try:
        phys = int(pltpu.get_tpu_info().vmem_capacity_bytes)
    except Exception:
        phys = 64 * 1024 * 1024  # conservative default (v7x per-TC physical)
    return min(phys * 3 // 4, 100 * 1024 * 1024)


def _embedding_gather_kernel(ids_ref, table_ref, out_ref, *, vocab, scale):
    """Fast path: vectorized VMEM row gather + VPU scale (no MXU work).

    ids_ref   : VMEM (TN, 1)     int32 -- token ids for this tile (sublanes)
    table_ref : VMEM (vocab, dim)      -- full embedding table (resident)
    out_ref   : VMEM (TN, dim)         -- output tile
    """
    tn, dim = out_ref.shape
    ids = jnp.clip(ids_ref[...], 0, vocab - 1)               # (TN, 1), clamp like jnp.take
    idx = jnp.broadcast_to(ids, (tn, dim))                   # (TN, dim)
    rows = jnp.take_along_axis(table_ref[...], idx, axis=0)  # vectorized gather
    out_ref[...] = (rows * scale).astype(out_ref.dtype)      # exact f32 scale on VPU


def _embedding_onehot_kernel(ids_ref, table_ref, out_ref, *, vocab, scale):
    """Fallback: exact one-hot MXU gather (used only if the gather can't lower).

    HIGHEST precision is kept because the table is f32 (exactness); the iota is
    regenerated per step on purpose -- caching it in scratch guarded by
    program_id==0 is unsafe with a "parallel" grid axis on megacore parts.
    """
    tn = out_ref.shape[0]
    ids = jnp.clip(ids_ref[...], 0, vocab - 1)                     # (TN, 1)
    col = lax.broadcasted_iota(jnp.int32, (tn, vocab), 1)          # (TN, vocab)
    onehot = jnp.where(col == ids, jnp.float32(scale), jnp.float32(0.0))
    out_ref[...] = jnp.dot(
        onehot,
        table_ref[...].astype(jnp.float32),
        preferred_element_type=jnp.float32,
        precision=lax.Precision.HIGHEST,
    ).astype(out_ref.dtype)


def _build_embedding_call(kernel_body, *, n_pad, tn, vocab, dim, out_dtype,
                          table_buffers, vmem_limit):
    if table_buffers == 1:
        # Constant index_map -> only one DMA ever happens; Buffered(1) stops the
        # pipeline from allocating a useless second table buffer.
        table_spec = pl.BlockSpec((vocab, dim), lambda i: (0, 0),
                                  pipeline_mode=pl.Buffered(1))
    else:
        table_spec = pl.BlockSpec((vocab, dim), lambda i: (0, 0))
    return pl.pallas_call(
        kernel_body,
        out_shape=jax.ShapeDtypeStruct((n_pad, dim), out_dtype),
        grid_spec=pltpu.PrefetchScalarGridSpec(
            num_scalar_prefetch=0,
            grid=(n_pad // tn,),
            in_specs=[
                pl.BlockSpec((tn, 1), lambda i: (i, 0)),  # token ids on sublanes
                table_spec,                               # resident table
            ],
            out_specs=pl.BlockSpec((tn, dim), lambda i: (i, 0)),
        ),
        compiler_params=pltpu.CompilerParams(
            dimension_semantics=("parallel",),            # shard tiles across TCs (v7x)
            vmem_limit_bytes=int(vmem_limit),
        ),
    )


def embeddings_forward(x_ids, table, *, tokens_per_block=1024):
    """Pallas equivalent of Embeddings.forward: lut(x) * sqrt(dim)."""
    vocab, dim = table.shape
    lead_shape = x_ids.shape
    n_tokens = 1
    for s in lead_shape:
        n_tokens *= int(s)
    scale = math.sqrt(dim)
    vmem_limit = _vmem_limit_bytes()

    # Tile size: as large as useful, sublane(8)-aligned.
    tn = min(int(tokens_per_block), _round_up(n_tokens, 8))
    tn = max(8, _round_up(tn, 8))
    # Ensure >=2 grid steps when possible so the "parallel" axis can actually
    # use both TensorCores on v7x (no effect on single-TC v5e/v6e).
    if n_tokens > 8 and _round_up(n_tokens, tn) // tn < 2:
        tn = max(8, _round_up((n_tokens + 1) // 2, 8))
    n_pad = _round_up(n_tokens, tn)

    # Per-TC VMEM budget check for the resident-table path.  On v7x each core
    # holds its OWN table copy (parallel token axis), so this is per-core.
    itemsize = table.dtype.itemsize
    table_bytes = vocab * dim * itemsize                    # Buffered(1) -> single copy
    io_bytes = 2 * (tn * dim * itemsize + tn * 4)           # double-buffered out + id tiles
    tmp_bytes = 3 * tn * max(vocab, dim) * 4                # gather / one-hot temporaries
    if table_bytes + io_bytes + tmp_bytes > vmem_limit - (8 << 20):
        # TODO(synk): HBM-resident table + per-row DMA gather path for big vocab.
        raise NotImplementedError(
            "embedding table too large for the resident-VMEM path on this part")

    ids = x_ids.reshape(n_tokens).astype(jnp.int32)
    if n_pad != n_tokens:
        ids = jnp.pad(ids, (0, n_pad - n_tokens))           # padded rows gather row 0
    ids = ids.reshape(n_pad, 1)                             # ids land on sublanes

    # Preferred config first; fall back only if a config fails to lower/compile
    # on the installed jax/Mosaic version.  (Production code would probe once
    # ahead of time; here each call is eager so the try/except is sufficient.)
    attempts = (
        (_embedding_gather_kernel, 1),   # gather + single-buffered table
        (_embedding_gather_kernel, 2),   # gather + default buffering
        (_embedding_onehot_kernel, 2),   # previously-validated exact fallback
    )
    out_flat = None
    last_err = None
    for body, table_buffers in attempts:
        try:
            call = _build_embedding_call(
                functools.partial(body, vocab=vocab, scale=scale),
                n_pad=n_pad, tn=tn, vocab=vocab, dim=dim,
                out_dtype=table.dtype, table_buffers=table_buffers,
                vmem_limit=vmem_limit)
            out_flat = jax.block_until_ready(call(ids, table))
            break
        except Exception as err:   # lowering / Mosaic compile failure -> next config
            last_err = err
            out_flat = None
    if out_flat is None:
        raise last_err

    if n_pad != n_tokens:
        out_flat = out_flat[:n_tokens]
    return out_flat.reshape(*lead_shape, dim)


if __name__ == "__main__":
    # Small shapes consistent with the module: vocab=64, dim=32, batch=2, seq=8
    vocab, dim = 64, 32
    B, S = 2, 8

    key = jax.random.PRNGKey(0)
    k_ids, k_tbl = jax.random.split(key)

    # Deterministic "parameters": nn.Embedding default init is N(0, 1)
    table = jax.random.normal(k_tbl, (vocab, dim), dtype=jnp.float32)
    x_ids = jax.random.randint(k_ids, (B, S), 0, vocab, dtype=jnp.int32)

    out = embeddings_forward(x_ids, table)
    out = jax.block_until_ready(out)

    # Pure-JAX reference: lut(x) * sqrt(dim)
    ref = jnp.take(table, x_ids, axis=0) * math.sqrt(dim)

    assert out.shape == (B, S, dim), out.shape
    assert out.dtype == table.dtype
    assert jnp.allclose(out, ref, atol=1e-5, rtol=1e-5), "mismatch vs reference"

    print("KERNEL_OK")
</pallas_src>

<mosaic_0001>
module attributes {stable_mosaic.version = 11 : i64} {
  func.func @_embedding_gather_kernel(%arg0: i32, %arg1: memref<8x1xi32, #tpu.memory_space<vmem>>, %arg2: memref<64x32xf32, #tpu.memory_space<vmem>>, %arg3: memref<8x32xf32, #tpu.memory_space<vmem>>) attributes {dimension_semantics = [#tpu.dimension_semantics<parallel>], iteration_bounds = array<i64: 2>, scalar_prefetch = 0 : i64, scratch_operands = 0 : i64, tpu.core_type = #tpu.core_type<tc>, window_params = [{transform_indices = @transform_0, window_bounds = array<i64: 8, 1>}, {pipeline_mode = #tpu.pipeline_mode<synchronous>, transform_indices = @transform_1, window_bounds = array<i64: 64, 32>}, {transform_indices = @transform_2, window_bounds = array<i64: 8, 32>}]} {
    %c0 = arith.constant 0 : index
    %c0_0 = arith.constant 0 : index
    %0 = vector.load %arg1[%c0, %c0_0] : memref<8x1xi32, #tpu.memory_space<vmem>>, vector<8x1xi32>
    %c0_i32 = arith.constant 0 : i32
    %c63_i32 = arith.constant 63 : i32
    %1 = vector.broadcast %c0_i32 : i32 to vector<8x1xi32>
    %2 = arith.maxsi %1, %0 : vector<8x1xi32>
    %3 = vector.broadcast %c63_i32 : i32 to vector<8x1xi32>
    %4 = arith.minsi %3, %2 : vector<8x1xi32>
    %5 = vector.shape_cast %4 : vector<8x1xi32> to vector<8x1xi32>
    %6 = vector.broadcast %5 : vector<8x1xi32> to vector<8x32xi32>
    %c0_1 = arith.constant 0 : index
    %c0_2 = arith.constant 0 : index
    %7 = vector.load %arg2[%c0_1, %c0_2] : memref<64x32xf32, #tpu.memory_space<vmem>>, vector<64x32xf32>
    %c0_i32_3 = arith.constant 0 : i32
    %8 = vector.broadcast %c0_i32_3 : i32 to vector<8x32xi32>
    %9 = arith.cmpi slt, %6, %8 : vector<8x32xi32>
    %c64_i32 = arith.constant 64 : i32
    %10 = vector.broadcast %c64_i32 : i32 to vector<8x32xi32>
    %11 = arith.addi %6, %10 : vector<8x32xi32>
    %12 = arith.select %9, %11, %6 : vector<8x32xi1>, vector<8x32xi32>
    %13 = vector.shape_cast %12 : vector<8x32xi32> to vector<8x32x1xi32>
    %14 = vector.shape_cast %13 : vector<8x32x1xi32> to vector<8x32xi32>
    %15 = tpu.dynamic_gather %7[%14] in [0] : vector<64x32xf32>, vector<8x32xi32> -> vector<8x32xf32>
    %cst = arith.constant 5.65685415 : f32
    %16 = vector.broadcast %cst : f32 to vector<8x32xf32>
    %17 = arith.mulf %15, %16 : vector<8x32xf32>
    %c0_4 = arith.constant 0 : index
    %c0_5 = arith.constant 0 : index
    %18 = vector.load %arg3[%c0_4, %c0_5] : memref<8x32xf32, #tpu.memory_space<vmem>>, vector<8x32xf32>
    tpu.vector_store %arg3[%c0_4, %c0_5], %17 {strides = array<i32>} : memref<8x32xf32, #tpu.memory_space<vmem>>, vector<8x32xf32>,
    return
  }
  func.func @transform_0(%arg0: i32) -> (i32, i32) {
    %c0_i32 = arith.constant 0 : i32
    %c0_i32_0 = arith.constant 0 : i32
    return %arg0, %c0_i32 : i32, i32
  }
  func.func @transform_1(%arg0: i32) -> (i32, i32) {
    %c0_i32 = arith.constant 0 : i32
    %c0_i32_0 = arith.constant 0 : i32
    %c0_i32_1 = arith.constant 0 : i32
    return %c0_i32, %c0_i32_0 : i32, i32
  }
  func.func @transform_2(%arg0: i32) -> (i32, i32) {
    %c0_i32 = arith.constant 0 : i32
    %c0_i32_0 = arith.constant 0 : i32
    return %arg0, %c0_i32 : i32, i32
  }
}

module attributes {stable_mosaic.version = 11 : i64} {
  func.func @_embedding_gather_kernel(%arg0: i32, %arg1: memref<8x1xi32, #tpu.memory_space<vmem>>, %arg2: memref<64x32xf32, #tpu.memory_space<vmem>>, %arg3: memref<8x32xf32, #tpu.memory_space<vmem>>) attributes {dimension_semantics = [#tpu.dimension_semantics<parallel>], iteration_bounds = array<i64: 2>, scalar_prefetch = 0 : i64, scratch_operands = 0 : i64, tpu.core_type = #tpu.core_type<tc>, window_params = [{transform_indices = @transform_0, window_bounds = array<i64: 8, 1>}, {pipeline_mode = #tpu.pipeline_mode<synchronous>, transform_indices = @transform_1, window_bounds = array<i64: 64, 32>}, {transform_indices = @transform_2, window_bounds = array<i64: 8, 32>}]} {
    %c0 = arith.constant 0 : index
    %c0_0 = arith.constant 0 : index
    %0 = vector.load %arg1[%c0, %c0_0] : memref<8x1xi32, #tpu.memory_space<vmem>>, vector<8x1xi32>
    %c0_i32 = arith.constant 0 : i32
    %c63_i32 = arith.constant 63 : i32
    %1 = vector.broadcast %c0_i32 : i32 to vector<8x1xi32>
    %2 = arith.maxsi %1, %0 : vector<8x1xi32>
    %3 = vector.broadcast %c63_i32 : i32 to vector<8x1xi32>
    %4 = arith.minsi %3, %2 : vector<8x1xi32>
    %5 = vector.shape_cast %4 : vector<8x1xi32> to vector<8x1xi32>
    %6 = vector.broadcast %5 : vector<8x1xi32> to vector<8x32xi32>
    %c0_1 = arith.constant 0 : index
    %c0_2 = arith.constant 0 : index
    %7 = vector.load %arg2[%c0_1, %c0_2] : memref<64x32xf32, #tpu.memory_space<vmem>>, vector<64x32xf32>
    %c0_i32_3 = arith.constant 0 : i32
    %8 = vector.broadcast %c0_i32_3 : i32 to vector<8x32xi32>
    %9 = arith.cmpi slt, %6, %8 : vector<8x32xi32>
    %c64_i32 = arith.constant 64 : i32
    %10 = vector.broadcast %c64_i32 : i32 to vector<8x32xi32>
    %11 = arith.addi %6, %10 : vector<8x32xi32>
    %12 = arith.select %9, %11, %6 : vector<8x32xi1>, vector<8x32xi32>
    %13 = vector.shape_cast %12 : vector<8x32xi32> to vector<8x32x1xi32>
    %14 = vector.shape_cast %13 : vector<8x32x1xi32> to vector<8x32xi32>
    %15 = tpu.dynamic_gather %7[%14] in [0] : vector<64x32xf32>, vector<8x32xi32> -> vector<8x32xf32>
    %cst = arith.constant 5.65685415 : f32
    %16 = vector.broadcast %cst : f32 to vector<8x32xf32>
    %17 = arith.mulf %15, %16 : vector<8x32xf32>
    %c0_4 = arith.constant 0 : index
    %c0_5 = arith.constant 0 : index
    %18 = vector.load %arg3[%c0_4, %c0_5] : memref<8x32xf32, #tpu.memory_space<vmem>>, vector<8x32xf32>
    tpu.vector_store %arg3[%c0_4, %c0_5], %17 {strides = array<i32>} : memref<8x32xf32, #tpu.memory_space<vmem>>, vector<8x32xf32>,
    return
  }
  func.func @transform_0(%arg0: i32) -> (i32, i32) {
    %c0_i32 = arith.constant 0 : i32
    %c0_i32_0 = arith.constant 0 : i32
    return %arg0, %c0_i32 : i32, i32
  }
  func.func @transform_1(%arg0: i32) -> (i32, i32) {
    %c0_i32 = arith.constant 0 : i32
    %c0_i32_0 = arith.constant 0 : i32
    %c0_i32_1 = arith.constant 0 : i32
    return %c0_i32, %c0_i32_0 : i32, i32
  }
  func.func @transform_2(%arg0: i32) -> (i32, i32) {
    %c0_i32 = arith.constant 0 : i32
    %c0_i32_0 = arith.constant 0 : i32
    return %arg0, %c0_i32 : i32, i32
  }
}

module attributes {stable_mosaic.version = 11 : i64} {
  func.func @_embedding_onehot_kernel(%arg0: i32, %arg1: memref<8x1xi32, #tpu.memory_space<vmem>>, %arg2: memref<64x32xf32, #tpu.memory_space<vmem>>, %arg3: memref<8x32xf32, #tpu.memory_space<vmem>>) attributes {dimension_semantics = [#tpu.dimension_semantics<parallel>], iteration_bounds = array<i64: 2>, scalar_prefetch = 0 : i64, scratch_operands = 0 : i64, tpu.core_type = #tpu.core_type<tc>, window_params = [{transform_indices = @transform_0, window_bounds = array<i64: 8, 1>}, {pipeline_mode = #tpu.pipeline_mode<synchronous>, transform_indices = @transform_1, window_bounds = array<i64: 64, 32>}, {transform_indices = @transform_2, window_bounds = array<i64: 8, 32>}]} {
    %c0 = arith.constant 0 : index
    %c0_0 = arith.constant 0 : index
    %0 = vector.load %arg1[%c0, %c0_0] : memref<8x1xi32, #tpu.memory_space<vmem>>, vector<8x1xi32>
    %c0_i32 = arith.constant 0 : i32
    %c63_i32 = arith.constant 63 : i32
    %1 = vector.broadcast %c0_i32 : i32 to vector<8x1xi32>
    %2 = arith.maxsi %1, %0 : vector<8x1xi32>
    %3 = vector.broadcast %c63_i32 : i32 to vector<8x1xi32>
    %4 = arith.minsi %3, %2 : vector<8x1xi32>
    %5 = tpu.iota {dimensions = array<i32: 1>} : vector<8x64xi32>
    %6 = vector.broadcast %4 : vector<8x1xi32> to vector<8x64xi32>
    %7 = arith.cmpi eq, %5, %6 : vector<8x64xi32>
    %cst = arith.constant 5.65685415 : f32
    %cst_1 = arith.constant 0.000000e+00 : f32
    %8 = vector.broadcast %cst : f32 to vector<8x64xf32>
    %9 = vector.broadcast %cst_1 : f32 to vector<8x64xf32>
    %10 = arith.select %7, %8, %9 : vector<8x64xi1>, vector<8x64xf32>
    %c0_2 = arith.constant 0 : index
    %c0_3 = arith.constant 0 : index
    %11 = vector.load %arg2[%c0_2, %c0_3] : memref<64x32xf32, #tpu.memory_space<vmem>>, vector<64x32xf32>
    %cst_4 = arith.constant dense<0.000000e+00> : vector<8x32xf32>
    %12 = tpu.matmul %10, %11, %cst_4 {dimension_numbers = #tpu.dot_dimension_numbers<[1], [0], [0], [1], [0, 0, 1, 1], [], []>, precision = #tpu.contract_precision<fp32>} : vector<8x64xf32>, vector<64x32xf32>, vector<8x32xf32> -> vector<8x32xf32>
    %c0_5 = arith.constant 0 : index
    %c0_6 = arith.constant 0 : index
    %13 = vector.load %arg3[%c0_5, %c0_6] : memref<8x32xf32, #tpu.memory_space<vmem>>, vector<8x32xf32>
    tpu.vector_store %arg3[%c0_5, %c0_6], %12 {strides = array<i32>} : memref<8x32xf32, #tpu.memory_space<vmem>>, vector<8x32xf32>,
    return
  }
  func.func @transform_0(%arg0: i32) -> (i32, i32) {
    %c0_i32 = arith.constant 0 : i32
    %c0_i32_0 = arith.constant 0 : i32
    return %arg0, %c0_i32 : i32, i32
  }
  func.func @transform_1(%arg0: i32) -> (i32, i32) {
    %c0_i32 = arith.constant 0 : i32
    %c0_i32_0 = arith.constant 0 : i32
    %c0_i32_1 = arith.constant 0 : i32
    return %c0_i32, %c0_i32_0 : i32, i32
  }
  func.func @transform_2(%arg0: i32) -> (i32, i32) {
    %c0_i32 = arith.constant 0 : i32
    %c0_i32_0 = arith.constant 0 : i32
    return %arg0, %c0_i32 : i32, i32
  }
}

</mosaic_0001>

<llo_original>
// kernel: tpu_custom_call.1
$region0: #{tpu_custom_call.1}
  #allocation0 [shape = 'u32[]', space=smem, size = 0x4, offset = 0x4, fixed_abs, tag = 'smem constant byte address 0x4 - core index']
  #allocation1 [shape = 'u32[144,128]{1,0:T(1,128)}', space=vmem, size = 0x12000, scoped, tag = 'internal scratch']
  %s0 = inlined_call_operand.vmem [shape: s32[16,1], index: 0, kind: input, shape index: {}]
  %s1 = inlined_call_operand.vmem [shape: f32[64,32], index: 1, kind: input, shape index: {}]
  %s2 = inlined_call_operand.hbm [shape: f32[16,32], index: 2, kind: output, shape index: {}]
  %s3 = sld [smem:[#allocation0]]
  $region41: #{tpu_custom_call.1} parent=0
    _
  %s5 = ssub.s32 1, %s3
  %s6 = scalar_select 0, %s5, %s3
  $region1: #{tpu_custom_call.1} parent=0
    #allocation2 [shape = 'u8[8192]{0}', space=vmem, size = 0x2000, scoped, tag = 'output window, operand 0']
    #allocation3 [shape = 's32[2]{0}', space=sflag, size = 0x8, scoped, tag = 'scoped memory for tpu_custom_call.1']
    %7 = vsyncpa [#allocation3], 0
    %s8 = scalar_lea.sflag [#allocation3], 1
    %9 = vsyncpa %s8, 0
    loop: start=0, step=1, limit=4
    $region2: #{tpu_custom_call.1} parent=1 // loop_pre_header
      _
    $region3: #{tpu_custom_call.1} parent=1 // loop_header
      %s11 = sphi 0, %s15
      %p12 = scmp.ge.s32.totalorder %s11, 4
      %s21 = sphi 0, %s23
      %s24 = sphi 0, %s21
      %s25 = sphi 0, %s24
      %s41 = sphi 0, %s25
      %s45 = sphi 0, %s45
      %s47 = sphi 0, %s45
      %s48 = sphi 0, %s47
      %s62 = sphi 0, %s48
      %s68 = sphi 0, %s70
      %s71 = sphi 0, %s68
      %s72 = sphi 0, %s71
      %s88 = sphi 0, %s72
    $region4: #{tpu_custom_call.1} parent=1 // loop_header_branch
      %14 = sbr.rel (%p12) target = $region8
    $region5: #{tpu_custom_call.1} parent=1 // loop_body
      %s16 = ssub.s32 %s11, 1
      %s17 = ssub.s32 %s11, 2
      %s18 = sadd.s32 %s11, 1
      %s19 = ssub.s32 %s11, %s18
      %p20 = scmp.eq.s32.totalorder %s19, 0
      %s22 = sadd.s32 %s21, 1
      %s23 = scalar_select %p20, %s21, %s22
      %p26 = pneg %p20
      %p27 = scmp.eq.s32.totalorder %s11, 1
      %p28 = por %p26, %p27
      %p29 = scmp.ne.s32.totalorder %s21, %s24
      %p30 = scmp.eq.s32.totalorder %s11, 0
      %p31 = por %p29, %p30
      %p32 = scmp.ne.s32.totalorder %s21, %s24
      %p33 = scmp.eq.s32.totalorder %s16, 1
      %p34 = por %p32, %p33
      %p35 = scmp.ne.s32.totalorder %s24, %s25
      %p36 = scmp.eq.s32.totalorder %s16, 0
      %p37 = por %p35, %p36
      %p38 = scmp.ne.s32.totalorder %s24, %s25
      %p39 = scmp.eq.s32.totalorder %s17, 1
      %p40 = por %p38, %p39
      %p42 = scmp.ne.s32.totalorder %s25, %s41
      %p43 = scmp.eq.s32.totalorder %s17, 0
      %p44 = por %p42, %p43
      %s46 = sadd.s32 %s45, 1
      %p49 = scmp.eq.s32.totalorder %s11, 1
      %p50 = scmp.ne.s32.totalorder %s45, %s47
      %p51 = scmp.eq.s32.totalorder %s11, 0
      %p52 = por %p50, %p51
      %p53 = scmp.ne.s32.totalorder %s45, %s47
      %p54 = scmp.eq.s32.totalorder %s16, 1
      %p55 = por %p53, %p54
      %p56 = scmp.ne.s32.totalorder %s47, %s48
      %p57 = scmp.eq.s32.totalorder %s16, 0
      %p58 = por %p56, %p57
      %p59 = scmp.ne.s32.totalorder %s47, %s48
      %p60 = scmp.eq.s32.totalorder %s17, 1
      %p61 = por %p59, %p60
      %p63 = scmp.ne.s32.totalorder %s48, %s62
      %p64 = scmp.eq.s32.totalorder %s17, 0
      %p65 = por %p63, %p64
      %s66 = ssub.s32 %s11, %s18
      %p67 = scmp.eq.s32.totalorder %s66, 0
      %s69 = sadd.s32 %s68, 1
      %s70 = scalar_select %p67, %s68, %s69
      %p73 = pneg %p67
      %p74 = scmp.eq.s32.totalorder %s11, 1
      %p75 = por %p73, %p74
      %p76 = scmp.ne.s32.totalorder %s68, %s71
      %p77 = scmp.eq.s32.totalorder %s11, 0
      %p78 = por %p76, %p77
      %p79 = scmp.ne.s32.totalorder %s68, %s71
      %p80 = scmp.eq.s32.totalorder %s16, 1
      %p81 = por %p79, %p80
      %p82 = scmp.ne.s32.totalorder %s71, %s72
      %p83 = scmp.eq.s32.totalorder %s16, 0
      %p84 = por %p82, %p83
      %p85 = scmp.ne.s32.totalorder %s71, %s72
      %p86 = scmp.eq.s32.totalorder %s17, 1
      %p87 = por %p85, %p86
      %p89 = scmp.ne.s32.totalorder %s72, %s88
      %p90 = scmp.eq.s32.totalorder %s17, 0
      %p91 = por %p89, %p90
      %p92 = scmp.le.s32.totalorder 1, %s11
      %p93 = scmp.lt.s32.totalorder %s11, 3
      %p94 = pnand %p92, %p93
      %p95 = pneg %p94
      // Predicated region
      $region9: #{tpu_custom_call.1} parent=5 // pred_check
        _
      $region10: #{tpu_custom_call.1} parent=5 // pred_check_branch
        %97 = sbr.rel (%p94) target = $region12
      $region11: #{tpu_custom_call.1} parent=5 // pred_region
        %s98 = ssub.s32 %s11, 1
        // Predicated region
        $region13: #{tpu_custom_call.1} parent=11 // pred_check
          %p99 = pneg %p58
        $region14: #{tpu_custom_call.1} parent=11 // pred_check_branch
          %101 = sbr.rel (%p99) target = $region16
        $region15: #{tpu_custom_call.1} parent=11 // pred_region
          _
        $region16: #{tpu_custom_call.1} parent=11 // pred_fallthru
          _
      $region12: #{tpu_custom_call.1} parent=5 // pred_fallthru
        _
      %p102 = scmp.lt.s32.totalorder %s11, 2
      // Predicated region
      $region17: #{tpu_custom_call.1} parent=5 // pred_check
        %p103 = pneg %p102
      $region18: #{tpu_custom_call.1} parent=5 // pred_check_branch
        %105 = sbr.rel (%p103) target = $region20
      $region19: #{tpu_custom_call.1} parent=5 // pred_region
        // Predicated region
        $region21: #{tpu_custom_call.1} parent=19 // pred_check
          %p106 = pneg %p31
        $region22: #{tpu_custom_call.1} parent=19 // pred_check_branch
          %108 = sbr.rel (%p106) target = $region24
        $region23: #{tpu_custom_call.1} parent=19 // pred_region
          %p109 = scmp.lt.s32.totalorder %s11, 1
          %s110 = scalar_select %p109, %s11, 1
          %s111 = smul.addr %s110, 8
          %s112 = scalar_lea.vmem %s0, %s111
        $region24: #{tpu_custom_call.1} parent=19 // pred_fallthru
          _
      $region20: #{tpu_custom_call.1} parent=5 // pred_fallthru
        _
      %p113 = scmp.le.s32.totalorder 1, %s11
      %p114 = scmp.lt.s32.totalorder %s11, 3
      %p115 = pnand %p113, %p114
      %p116 = pneg %p115
      // Predicated region
      $region25: #{tpu_custom_call.1} parent=5 // pred_check
        _
      $region26: #{tpu_custom_call.1} parent=5 // pred_check_branch
        %118 = sbr.rel (%p115) target = $region28
      $region27: #{tpu_custom_call.1} parent=5 // pred_region
        %s119 = ssub.s32 %s11, 1
        %p120 = scmp.lt.s32.totalorder %s16, 1
        %s121 = scalar_select %p120, %s16, 1
        %s122 = smul.addr %s121, 8
        %s123 = scalar_lea.vmem %s0, %s122
        %p124 = pneg %p37
        %p125 = pneg %p34
        %p126 = pneg %p58
        %p127 = pneg %p55
        %p128 = pneg %p84
        %p129 = pneg %p81
        %s130 = sand.u32 %s71, 1
        %s131 = scalar_lea.sflag [#allocation3], %s130
        %s132 = sand.u32 %s71, 1
        %s133 = smul.addr %s132, 8
        %s134 = scalar_lea.vmem [#allocation2], %s133
        %p135 = scmp.lt.s32.totalorder %s16, 1
        %s136 = scalar_select %p135, %s16, 1
        %s137 = smul.addr %s136, 8
        %s138 = scalar_lea.vmem %s0, %s137
        %v139 = vld [vmem:[%s138] sm:$0xff]
        %vm140 = vcmp.gt.s32.totalorder %v139, 0
        %v141 = vsel %vm140, %v139, 0
        %vm142 = vcmp.lt.s32.totalorder %v141, 63
        %v143 = vsel %vm142, %v141, 63
        %v144 = vlaneseq
        %v145 = vand.u32 %v144, 127
        %146 = vset.pattern.permute.xlu0 0
        %147 = vperm.xlu0 %146, %v143
        %v148 = vpop.permute.xlu0 %147
        %vm149 = vcmp.eq.s32.totalorder %v145, %v148
        %v150 = vsel %vm149, 5.656854, 0.0
        %v151 = vld [vmem:[%s1] sm:$0xff]
        %v152 = vld [vmem:[%s1 + $0x8] sm:$0xff]
        %v153 = vld [vmem:[%s1 + $0x10] sm:$0xff]
        %v154 = vld [vmem:[%s1 + $0x18] sm:$0xff]
        %v155 = vld [vmem:[%s1 + $0x20] sm:$0xff]
        %v156 = vld [vmem:[%s1 + $0x28] sm:$0xff]
        %v157 = vld [vmem:[%s1 + $0x30] sm:$0xff]
        %v158 = vld [vmem:[%s1 + $0x38] sm:$0xff]
        %vm159 = vcmask 523264
        %v161 = vsel %vm159, %v150, 0
        %163 = vmatprep.subr.mxu0 0.0
        %164 = vmatpush1.msra.mxu0 0.0
        %165 = vmatprep.subr.mxu0 0.0
        %166 = vmatpush1.msra.mxu0 0.0
        %167 = vmatprep.subr.mxu0 0.0
        %168 = vmatpush1.msra.mxu0 0.0
        %169 = vmatprep.subr.mxu0 0.0
        %170 = vmatpush1.msra.mxu0 0.0
        %171 = vmatprep.subr.mxu0 0.0
        %172 = vmatpush1.msra.mxu0 0.0
        %173 = vmatprep.subr.mxu0 0.0
        %174 = vmatpush1.msra.mxu0 0.0
        %175 = vmatprep.subr.mxu0 0.0
        %176 = vmatpush1.msra.mxu0 0.0
        %177 = vmatprep.subr.mxu0 0.0
        %178 = vmatpush1.msra.mxu0 0.0
        %179 = vmatprep.subr.mxu0 0.0
        %v180 = vand.u32 %v158, 4294901760
        %181 = vmatpush1.msra.mxu0 %v180
        %182 = vmatprep.subr.mxu0 0.0
        %v183 = vand.u32 %v157, 4294901760
        %184 = vmatpush1.msra.mxu0 %v183
        %185 = vmatprep.subr.mxu0 0.0
        %v186 = vand.u32 %v156, 4294901760
        %187 = vmatpush1.msra.mxu0 %v186
        %188 = vmatprep.subr.mxu0 0.0
        %v189 = vand.u32 %v155, 4294901760
        %190 = vmatpush1.msra.mxu0 %v189
        %191 = vmatprep.subr.mxu0 0.0
        %v192 = vand.u32 %v154, 4294901760
        %193 = vmatpush1.msra.mxu0 %v192
        %194 = vmatprep.subr.mxu0 0.0
        %v195 = vand.u32 %v153, 4294901760
        %196 = vmatpush1.msra.mxu0 %v195
        %197 = vmatprep.subr.mxu0 0.0
        %v198 = vand.u32 %v152, 4294901760
        %199 = vmatpush1.msra.mxu0 %v198
        %200 = vmatprep.subr.mxu0 0.0
        %v201 = vand.u32 %v151, 4294901760
        %202 = vmatpush1.msra.mxu0 %v201
        %203 = vmatprep.subr.mxu0 0.0
        %204 = vmatpush2.msra.mxu0 0.0
        %205 = vmatprep.subr.mxu0 0.0
        %206 = vmatpush2.msra.mxu0 0.0
        %207 = vmatprep.subr.mxu0 0.0
        %208 = vmatpush2.msra.mxu0 0.0
        %209 = vmatprep.subr.mxu0 0.0
        %210 = vmatpush2.msra.mxu0 0.0
        %211 = vmatprep.subr.mxu0 0.0
        %212 = vmatpush2.msra.mxu0 0.0
        %213 = vmatprep.subr.mxu0 0.0
        %214 = vmatpush2.msra.mxu0 0.0
        %215 = vmatprep.subr.mxu0 0.0
        %216 = vmatpush2.msra.mxu0 0.0
        %217 = vmatprep.subr.mxu0 0.0
        %218 = vmatpush2.msra.mxu0 0.0
        %219 = vmatprep.subr.mxu0 0.0
        %220 = vmatpush2.msra.mxu0 0.0
        %221 = vmatprep.subr.mxu0 0.0
        %222 = vmatpush2.msra.mxu0 0.0
        %223 = vmatprep.subr.mxu0 0.0
        %224 = vmatpush2.msra.mxu0 0.0
        %225 = vmatprep.subr.mxu0 0.0
        %226 = vmatpush2.msra.mxu0 0.0
        %227 = vmatprep.subr.mxu0 0.0
        %228 = vmatpush2.msra.mxu0 0.0
        %229 = vmatprep.subr.mxu0 0.0
        %230 = vmatpush2.msra.mxu0 0.0
        %231 = vmatprep.subr.mxu0 0.0
        %232 = vmatpush2.msra.mxu0 0.0
        %233 = vmatprep.subr.mxu0 0.0
        %234 = vmatpush2.msra.mxu0 0.0
        %235 = vmatprep.mubr.f32.mxu0 0.0
        %v236 = vand.u32 %v161, 4294901760
        %v237 = vsub.f32 %v161, %v236
        %v238 = vand.u32 %v237, 4294901760
        %v239 = vsub.f32 %v237, %v238
        %v240 = vand.u32 %v239, 4294901760
        %241 = vmatmul.mubr.f32.gmra.mxu0 %v240
        %v242 = vpop.f32.mrf.mxu0
        %v243 = vadd.f32 0.0, %v242
        %v244 = vpop.f32.mrf.mxu0
        %245 = vdwg.mxu0
        %246 = vmatprep.subr.mxu0 0.0
        %247 = vmatpush1.msra.mxu0 0.0
        %248 = vmatprep.subr.mxu0 0.0
        %249 = vmatpush1.msra.mxu0 0.0
        %250 = vmatprep.subr.mxu0 0.0
        %251 = vmatpush1.msra.mxu0 0.0
        %252 = vmatprep.subr.mxu0 0.0
        %253 = vmatpush1.msra.mxu0 0.0
        %254 = vmatprep.subr.mxu0 0.0
        %255 = vmatpush1.msra.mxu0 0.0
        %256 = vmatprep.subr.mxu0 0.0
        %257 = vmatpush1.msra.mxu0 0.0
        %258 = vmatprep.subr.mxu0 0.0
        %259 = vmatpush1.msra.mxu0 0.0
        %260 = vmatprep.subr.mxu0 0.0
        %261 = vmatpush1.msra.mxu0 0.0
        %262 = vmatprep.subr.mxu0 0.0
        %v263 = vand.u32 %v158, 4294901760
        %v264 = vsub.f32 %v158, %v263
        %v265 = vand.u32 %v264, 4294901760
        %v266 = vsub.f32 %v264, %v265
        %v267 = vand.u32 %v266, 4294901760
        %268 = vmatpush1.msra.mxu0 %v267
        %269 = vmatprep.subr.mxu0 0.0
        %v270 = vand.u32 %v157, 4294901760
        %v271 = vsub.f32 %v157, %v270
        %v272 = vand.u32 %v271, 4294901760
        %v273 = vsub.f32 %v271, %v272
        %v274 = vand.u32 %v273, 4294901760
        %275 = vmatpush1.msra.mxu0 %v274
        %276 = vmatprep.subr.mxu0 0.0
        %v277 = vand.u32 %v156, 4294901760
        %v278 = vsub.f32 %v156, %v277
        %v279 = vand.u32 %v278, 4294901760
        %v280 = vsub.f32 %v278, %v279
        %v281 = vand.u32 %v280, 4294901760
        %282 = vmatpush1.msra.mxu0 %v281
        %283 = vmatprep.subr.mxu0 0.0
        %v284 = vand.u32 %v155, 4294901760
        %v285 = vsub.f32 %v155, %v284
        %v286 = vand.u32 %v285, 4294901760
        %v287 = vsub.f32 %v285, %v286
        %v288 = vand.u32 %v287, 4294901760
        %289 = vmatpush1.msra.mxu0 %v288
        %290 = vmatprep.subr.mxu0 0.0
        %v291 = vand.u32 %v154, 4294901760
        %v292 = vsub.f32 %v154, %v291
        %v293 = vand.u32 %v292, 4294901760
        %v294 = vsub.f32 %v292, %v293
        %v295 = vand.u32 %v294, 4294901760
        %296 = vmatpush1.msra.mxu0 %v295
        %297 = vmatprep.subr.mxu0 0.0
        %v298 = vand.u32 %v153, 4294901760
        %v299 = vsub.f32 %v153, %v298
        %v300 = vand.u32 %v299, 4294901760
        %v301 = vsub.f32 %v299, %v300
        %v302 = vand.u32 %v301, 4294901760
        %303 = vmatpush1.msra.mxu0 %v302
        %304 = vmatprep.subr.mxu0 0.0
        %v305 = vand.u32 %v152, 4294901760
        %v306 = vsub.f32 %v152, %v305
        %v307 = vand.u32 %v306, 4294901760
        %v308 = vsub.f32 %v306, %v307
        %v309 = vand.u32 %v308, 4294901760
        %310 = vmatpush1.msra.mxu0 %v309
        %311 = vmatprep.subr.mxu0 0.0
        %v312 = vand.u32 %v151, 4294901760
        %v313 = vsub.f32 %v151, %v312
        %v314 = vand.u32 %v313, 4294901760
        %v315 = vsub.f32 %v313, %v314
        %v316 = vand.u32 %v315, 4294901760
        %317 = vmatpush1.msra.mxu0 %v316
        %318 = vmatprep.subr.mxu0 0.0
        %319 = vmatpush2.msra.mxu0 0.0
        %320 = vmatprep.subr.mxu0 0.0
        %321 = vmatpush2.msra.mxu0 0.0
        %322 = vmatprep.subr.mxu0 0.0
        %323 = vmatpush2.msra.mxu0 0.0
        %324 = vmatprep.subr.mxu0 0.0
        %325 = vmatpush2.msra.mxu0 0.0
        %326 = vmatprep.subr.mxu0 0.0
        %327 = vmatpush2.msra.mxu0 0.0
        %328 = vmatprep.subr.mxu0 0.0
        %329 = vmatpush2.msra.mxu0 0.0
        %330 = vmatprep.subr.mxu0 0.0
        %331 = vmatpush2.msra.mxu0 0.0
        %332 = vmatprep.subr.mxu0 0.0
        %333 = vmatpush2.msra.mxu0 0.0
        %334 = vmatprep.subr.mxu0 0.0
        %335 = vmatpush2.msra.mxu0 0.0
        %336 = vmatprep.subr.mxu0 0.0
        %337 = vmatpush2.msra.mxu0 0.0
        %338 = vmatprep.subr.mxu0 0.0
        %339 = vmatpush2.msra.mxu0 0.0
        %340 = vmatprep.subr.mxu0 0.0
        %341 = vmatpush2.msra.mxu0 0.0
        %342 = vmatprep.subr.mxu0 0.0
        %343 = vmatpush2.msra.mxu0 0.0
        %344 = vmatprep.subr.mxu0 0.0
        %345 = vmatpush2.msra.mxu0 0.0
        %346 = vmatprep.subr.mxu0 0.0
        %347 = vmatpush2.msra.mxu0 0.0
        %348 = vmatprep.subr.mxu0 0.0
        %349 = vmatpush2.msra.mxu0 0.0
        %350 = vmatprep.mubr.f32.mxu0 0.0
        %v351 = vand.u32 %v161, 4294901760
        %352 = vmatmul.mubr.f32.gmra.mxu0 %v351
        %v353 = vpop.f32.mrf.mxu0
        %v354 = vadd.f32 %v243, %v353
        %v355 = vpop.f32.mrf.mxu0
        %356 = vdwg.mxu0
        %357 = vmatprep.subr.mxu0 0.0
        %358 = vmatpush1.msra.mxu0 0.0
        %359 = vmatprep.subr.mxu0 0.0
        %360 = vmatpush1.msra.mxu0 0.0
        %361 = vmatprep.subr.mxu0 0.0
        %362 = vmatpush1.msra.mxu0 0.0
        %363 = vmatprep.subr.mxu0 0.0
        %364 = vmatpush1.msra.mxu0 0.0
        %365 = vmatprep.subr.mxu0 0.0
        %366 = vmatpush1.msra.mxu0 0.0
        %367 = vmatprep.subr.mxu0 0.0
        %368 = vmatpush1.msra.mxu0 0.0
        %369 = vmatprep.subr.mxu0 0.0
        %370 = vmatpush1.msra.mxu0 0.0
        %371 = vmatprep.subr.mxu0 0.0
        %372 = vmatpush1.msra.mxu0 0.0
        %373 = vmatprep.subr.mxu0 0.0
        %v374 = vand.u32 %v158, 4294901760
        %v375 = vsub.f32 %v158, %v374
        %376 = vmatpush1.msra.mxu0 %v375
        %377 = vmatprep.subr.mxu0 0.0
        %v378 = vand.u32 %v157, 4294901760
        %v379 = vsub.f32 %v157, %v378
        %380 = vmatpush1.msra.mxu0 %v379
        %381 = vmatprep.subr.mxu0 0.0
        %v382 = vand.u32 %v156, 4294901760
        %v383 = vsub.f32 %v156, %v382
        %384 = vmatpush1.msra.mxu0 %v383
        %385 = vmatprep.subr.mxu0 0.0
        %v386 = vand.u32 %v155, 4294901760
        %v387 = vsub.f32 %v155, %v386
        %388 = vmatpush1.msra.mxu0 %v387
        %389 = vmatprep.subr.mxu0 0.0
        %v390 = vand.u32 %v154, 4294901760
        %v391 = vsub.f32 %v154, %v390
        %392 = vmatpush1.msra.mxu0 %v391
        %393 = vmatprep.subr.mxu0 0.0
        %v394 = vand.u32 %v153, 4294901760
        %v395 = vsub.f32 %v153, %v394
        %396 = vmatpush1.msra.mxu0 %v395
        %397 = vmatprep.subr.mxu0 0.0
        %v398 = vand.u32 %v152, 4294901760
        %v399 = vsub.f32 %v152, %v398
        %400 = vmatpush1.msra.mxu0 %v399
        %401 = vmatprep.subr.mxu0 0.0
        %v402 = vand.u32 %v151, 4294901760
        %v403 = vsub.f32 %v151, %v402
        %404 = vmatpush1.msra.mxu0 %v403
        %405 = vmatprep.subr.mxu0 0.0
        %406 = vmatpush2.msra.mxu0 0.0
        %407 = vmatprep.subr.mxu0 0.0
        %408 = vmatpush2.msra.mxu0 0.0
        %409 = vmatprep.subr.mxu0 0.0
        %410 = vmatpush2.msra.mxu0 0.0
        %411 = vmatprep.subr.mxu0 0.0
        %412 = vmatpush2.msra.mxu0 0.0
        %413 = vmatprep.subr.mxu0 0.0
        %414 = vmatpush2.msra.mxu0 0.0
        %415 = vmatprep.subr.mxu0 0.0
        %416 = vmatpush2.msra.mxu0 0.0
        %417 = vmatprep.subr.mxu0 0.0
        %418 = vmatpush2.msra.mxu0 0.0
        %419 = vmatprep.subr.mxu0 0.0
        %420 = vmatpush2.msra.mxu0 0.0
        %421 = vmatprep.subr.mxu0 0.0
        %422 = vmatpush2.msra.mxu0 0.0
        %423 = vmatprep.subr.mxu0 0.0
        %424 = vmatpush2.msra.mxu0 0.0
        %425 = vmatprep.subr.mxu0 0.0
        %426 = vmatpush2.msra.mxu0 0.0
        %427 = vmatprep.subr.mxu0 0.0
        %428 = vmatpush2.msra.mxu0 0.0
        %429 = vmatprep.subr.mxu0 0.0
        %430 = vmatpush2.msra.mxu0 0.0
        %431 = vmatprep.subr.mxu0 0.0
        %432 = vmatpush2.msra.mxu0 0.0
        %433 = vmatprep.subr.mxu0 0.0
        %434 = vmatpush2.msra.mxu0 0.0
        %435 = vmatprep.subr.mxu0 0.0
        %436 = vmatpush2.msra.mxu0 0.0
        %437 = vmatprep.mubr.f32.mxu0 0.0
        %v438 = vand.u32 %v161, 4294901760
        %v439 = vsub.f32 %v161, %v438
        %440 = vmatmul.mubr.f32.gmra.mxu0 %v439
        %v441 = vpop.f32.mrf.mxu0
        %v442 = vadd.f32 %v354, %v441
        %v443 = vpop.f32.mrf.mxu0
        %444 = vdwg.mxu0
        %445 = vmatprep.subr.mxu0 0.0
        %446 = vmatpush1.msra.mxu0 0.0
        %447 = vmatprep.subr.mxu0 0.0
        %448 = vmatpush1.msra.mxu0 0.0
        %449 = vmatprep.subr.mxu0 0.0
        %450 = vmatpush1.msra.mxu0 0.0
        %451 = vmatprep.subr.mxu0 0.0
        %452 = vmatpush1.msra.mxu0 0.0
        %453 = vmatprep.subr.mxu0 0.0
        %454 = vmatpush1.msra.mxu0 0.0
        %455 = vmatprep.subr.mxu0 0.0
        %456 = vmatpush1.msra.mxu0 0.0
        %457 = vmatprep.subr.mxu0 0.0
        %458 = vmatpush1.msra.mxu0 0.0
        %459 = vmatprep.subr.mxu0 0.0
        %460 = vmatpush1.msra.mxu0 0.0
        %461 = vmatprep.subr.mxu0 0.0
        %v462 = vand.u32 %v158, 4294901760
        %463 = vmatpush1.msra.mxu0 %v462
        %464 = vmatprep.subr.mxu0 0.0
        %v465 = vand.u32 %v157, 4294901760
        %466 = vmatpush1.msra.mxu0 %v465
        %467 = vmatprep.subr.mxu0 0.0
        %v468 = vand.u32 %v156, 4294901760
        %469 = vmatpush1.msra.mxu0 %v468
        %470 = vmatprep.subr.mxu0 0.0
        %v471 = vand.u32 %v155, 4294901760
        %472 = vmatpush1.msra.mxu0 %v471
        %473 = vmatprep.subr.mxu0 0.0
        %v474 = vand.u32 %v154, 4294901760
        %475 = vmatpush1.msra.mxu0 %v474
        %476 = vmatprep.subr.mxu0 0.0
        %v477 = vand.u32 %v153, 4294901760
        %478 = vmatpush1.msra.mxu0 %v477
        %479 = vmatprep.subr.mxu0 0.0
        %v480 = vand.u32 %v152, 4294901760
        %481 = vmatpush1.msra.mxu0 %v480
        %482 = vmatprep.subr.mxu0 0.0
        %v483 = vand.u32 %v151, 4294901760
        %484 = vmatpush1.msra.mxu0 %v483
        %485 = vmatprep.subr.mxu0 0.0
        %486 = vmatpush2.msra.mxu0 0.0
        %487 = vmatprep.subr.mxu0 0.0
        %488 = vmatpush2.msra.mxu0 0.0
        %489 = vmatprep.subr.mxu0 0.0
        %490 = vmatpush2.msra.mxu0 0.0
        %491 = vmatprep.subr.mxu0 0.0
        %492 = vmatpush2.msra.mxu0 0.0
        %493 = vmatprep.subr.mxu0 0.0
        %494 = vmatpush2.msra.mxu0 0.0
        %495 = vmatprep.subr.mxu0 0.0
        %496 = vmatpush2.msra.mxu0 0.0
        %497 = vmatprep.subr.mxu0 0.0
        %498 = vmatpush2.msra.mxu0 0.0
        %499 = vmatprep.subr.mxu0 0.0
        %500 = vmatpush2.msra.mxu0 0.0
        %501 = vmatprep.subr.mxu0 0.0
        %502 = vmatpush2.msra.mxu0 0.0
        %503 = vmatprep.subr.mxu0 0.0
        %504 = vmatpush2.msra.mxu0 0.0
        %505 = vmatprep.subr.mxu0 0.0
        %506 = vmatpush2.msra.mxu0 0.0
        %507 = vmatprep.subr.mxu0 0.0
        %508 = vmatpush2.msra.mxu0 0.0
        %509 = vmatprep.subr.mxu0 0.0
        %510 = vmatpush2.msra.mxu0 0.0
        %511 = vmatprep.subr.mxu0 0.0
        %512 = vmatpush2.msra.mxu0 0.0
        %513 = vmatprep.subr.mxu0 0.0
        %514 = vmatpush2.msra.mxu0 0.0
        %515 = vmatprep.subr.mxu0 0.0
        %516 = vmatpush2.msra.mxu0 0.0
        %517 = vmatprep.mubr.f32.mxu0 0.0
        %v518 = vand.u32 %v161, 4294901760
        %v519 = vsub.f32 %v161, %v518
        %v520 = vand.u32 %v519, 4294901760
        %521 = vmatmul.mubr.f32.gmra.mxu0 %v520
        %v522 = vpop.f32.mrf.mxu0
        %v523 = vadd.f32 %v442, %v522
        %v524 = vpop.f32.mrf.mxu0
        %525 = vdwg.mxu0
        %526 = vmatprep.subr.mxu0 0.0
        %527 = vmatpush1.msra.mxu0 0.0
        %528 = vmatprep.subr.mxu0 0.0
        %529 = vmatpush1.msra.mxu0 0.0
        %530 = vmatprep.subr.mxu0 0.0
        %531 = vmatpush1.msra.mxu0 0.0
        %532 = vmatprep.subr.mxu0 0.0
        %533 = vmatpush1.msra.mxu0 0.0
        %534 = vmatprep.subr.mxu0 0.0
        %535 = vmatpush1.msra.mxu0 0.0
        %536 = vmatprep.subr.mxu0 0.0
        %537 = vmatpush1.msra.mxu0 0.0
        %538 = vmatprep.subr.mxu0 0.0
        %539 = vmatpush1.msra.mxu0 0.0
        %540 = vmatprep.subr.mxu0 0.0
        %541 = vmatpush1.msra.mxu0 0.0
        %542 = vmatprep.subr.mxu0 0.0
        %v543 = vand.u32 %v158, 4294901760
        %v544 = vsub.f32 %v158, %v543
        %v545 = vand.u32 %v544, 4294901760
        %546 = vmatpush1.msra.mxu0 %v545
        %547 = vmatprep.subr.mxu0 0.0
        %v548 = vand.u32 %v157, 4294901760
        %v549 = vsub.f32 %v157, %v548
        %v550 = vand.u32 %v549, 4294901760
        %551 = vmatpush1.msra.mxu0 %v550
        %552 = vmatprep.subr.mxu0 0.0
        %v553 = vand.u32 %v156, 4294901760
        %v554 = vsub.f32 %v156, %v553
        %v555 = vand.u32 %v554, 4294901760
        %556 = vmatpush1.msra.mxu0 %v555
        %557 = vmatprep.subr.mxu0 0.0
        %v558 = vand.u32 %v155, 4294901760
        %v559 = vsub.f32 %v155, %v558
        %v560 = vand.u32 %v559, 4294901760
        %561 = vmatpush1.msra.mxu0 %v560
        %562 = vmatprep.subr.mxu0 0.0
        %v563 = vand.u32 %v154, 4294901760
        %v564 = vsub.f32 %v154, %v563
        %v565 = vand.u32 %v564, 4294901760
        %566 = vmatpush1.msra.mxu0 %v565
        %567 = vmatprep.subr.mxu0 0.0
        %v568 = vand.u32 %v153, 4294901760
        %v569 = vsub.f32 %v153, %v568
        %v570 = vand.u32 %v569, 4294901760
        %571 = vmatpush1.msra.mxu0 %v570
        %572 = vmatprep.subr.mxu0 0.0
        %v573 = vand.u32 %v152, 4294901760
        %v574 = vsub.f32 %v152, %v573
        %v575 = vand.u32 %v574, 4294901760
        %576 = vmatpush1.msra.mxu0 %v575
        %577 = vmatprep.subr.mxu0 0.0
        %v578 = vand.u32 %v151, 4294901760
        %v579 = vsub.f32 %v151, %v578
        %v580 = vand.u32 %v579, 4294901760
        %581 = vmatpush1.msra.mxu0 %v580
        %582 = vmatprep.subr.mxu0 0.0
        %583 = vmatpush2.msra.mxu0 0.0
        %584 = vmatprep.subr.mxu0 0.0
        %585 = vmatpush2.msra.mxu0 0.0
        %586 = vmatprep.subr.mxu0 0.0
        %587 = vmatpush2.msra.mxu0 0.0
        %588 = vmatprep.subr.mxu0 0.0
        %589 = vmatpush2.msra.mxu0 0.0
        %590 = vmatprep.subr.mxu0 0.0
        %591 = vmatpush2.msra.mxu0 0.0
        %592 = vmatprep.subr.mxu0 0.0
        %593 = vmatpush2.msra.mxu0 0.0
        %594 = vmatprep.subr.mxu0 0.0
        %595 = vmatpush2.msra.mxu0 0.0
        %596 = vmatprep.subr.mxu0 0.0
        %597 = vmatpush2.msra.mxu0 0.0
        %598 = vmatprep.subr.mxu0 0.0
        %599 = vmatpush2.msra.mxu0 0.0
        %600 = vmatprep.subr.mxu0 0.0
        %601 = vmatpush2.msra.mxu0 0.0
        %602 = vmatprep.subr.mxu0 0.0
        %603 = vmatpush2.msra.mxu0 0.0
        %604 = vmatprep.subr.mxu0 0.0
        %605 = vmatpush2.msra.mxu0 0.0
        %606 = vmatprep.subr.mxu0 0.0
        %607 = vmatpush2.msra.mxu0 0.0
        %608 = vmatprep.subr.mxu0 0.0
        %609 = vmatpush2.msra.mxu0 0.0
        %610 = vmatprep.subr.mxu0 0.0
        %611 = vmatpush2.msra.mxu0 0.0
        %612 = vmatprep.subr.mxu0 0.0
        %613 = vmatpush2.msra.mxu0 0.0
        %614 = vmatprep.mubr.f32.mxu0 0.0
        %v615 = vand.u32 %v161, 4294901760
        %616 = vmatmul.mubr.f32.gmra.mxu0 %v615
        %v617 = vpop.f32.mrf.mxu0
        %v618 = vadd.f32 %v523, %v617
        %v619 = vpop.f32.mrf.mxu0
        %620 = vdwg.mxu0
        %621 = vmatprep.subr.mxu0 0.0
        %622 = vmatpush1.msra.mxu0 0.0
        %623 = vmatprep.subr.mxu0 0.0
        %624 = vmatpush1.msra.mxu0 0.0
        %625 = vmatprep.subr.mxu0 0.0
        %626 = vmatpush1.msra.mxu0 0.0
        %627 = vmatprep.subr.mxu0 0.0
        %628 = vmatpush1.msra.mxu0 0.0
        %629 = vmatprep.subr.mxu0 0.0
        %630 = vmatpush1.msra.mxu0 0.0
        %631 = vmatprep.subr.mxu0 0.0
        %632 = vmatpush1.msra.mxu0 0.0
        %633 = vmatprep.subr.mxu0 0.0
        %634 = vmatpush1.msra.mxu0 0.0
        %635 = vmatprep.subr.mxu0 0.0
        %636 = vmatpush1.msra.mxu0 0.0
        %637 = vmatprep.subr.mxu0 0.0
        %v638 = vand.u32 %v158, 4294901760
        %639 = vmatpush1.msra.mxu0 %v638
        %640 = vmatprep.subr.mxu0 0.0
        %v641 = vand.u32 %v157, 4294901760
        %642 = vmatpush1.msra.mxu0 %v641
        %643 = vmatprep.subr.mxu0 0.0
        %v644 = vand.u32 %v156, 4294901760
        %645 = vmatpush1.msra.mxu0 %v644
        %646 = vmatprep.subr.mxu0 0.0
        %v647 = vand.u32 %v155, 4294901760
        %648 = vmatpush1.msra.mxu0 %v647
        %649 = vmatprep.subr.mxu0 0.0
        %v650 = vand.u32 %v154, 4294901760
        %651 = vmatpush1.msra.mxu0 %v650
        %652 = vmatprep.subr.mxu0 0.0
        %v653 = vand.u32 %v153, 4294901760
        %654 = vmatpush1.msra.mxu0 %v653
        %655 = vmatprep.subr.mxu0 0.0
        %v656 = vand.u32 %v152, 4294901760
        %657 = vmatpush1.msra.mxu0 %v656
        %658 = vmatprep.subr.mxu0 0.0
        %v659 = vand.u32 %v151, 4294901760
        %660 = vmatpush1.msra.mxu0 %v659
        %661 = vmatprep.subr.mxu0 0.0
        %662 = vmatpush2.msra.mxu0 0.0
        %663 = vmatprep.subr.mxu0 0.0
        %664 = vmatpush2.msra.mxu0 0.0
        %665 = vmatprep.subr.mxu0 0.0
        %666 = vmatpush2.msra.mxu0 0.0
        %667 = vmatprep.subr.mxu0 0.0
        %668 = vmatpush2.msra.mxu0 0.0
        %669 = vmatprep.subr.mxu0 0.0
        %670 = vmatpush2.msra.mxu0 0.0
        %671 = vmatprep.subr.mxu0 0.0
        %672 = vmatpush2.msra.mxu0 0.0
        %673 = vmatprep.subr.mxu0 0.0
        %674 = vmatpush2.msra.mxu0 0.0
        %675 = vmatprep.subr.mxu0 0.0
        %676 = vmatpush2.msra.mxu0 0.0
        %677 = vmatprep.subr.mxu0 0.0
        %678 = vmatpush2.msra.mxu0 0.0
        %679 = vmatprep.subr.mxu0 0.0
        %680 = vmatpush2.msra.mxu0 0.0
        %681 = vmatprep.subr.mxu0 0.0
        %682 = vmatpush2.msra.mxu0 0.0
        %683 = vmatprep.subr.mxu0 0.0
        %684 = vmatpush2.msra.mxu0 0.0
        %685 = vmatprep.subr.mxu0 0.0
        %686 = vmatpush2.msra.mxu0 0.0
        %687 = vmatprep.subr.mxu0 0.0
        %688 = vmatpush2.msra.mxu0 0.0
        %689 = vmatprep.subr.mxu0 0.0
        %690 = vmatpush2.msra.mxu0 0.0
        %691 = vmatprep.subr.mxu0 0.0
        %692 = vmatpush2.msra.mxu0 0.0
        %693 = vmatprep.mubr.f32.mxu0 0.0
        %v694 = vand.u32 %v161, 4294901760
        %695 = vmatmul.mubr.f32.gmra.mxu0 %v694
        %v696 = vpop.f32.mrf.mxu0
        %v697 = vadd.f32 %v618, %v696
        %v698 = vpop.f32.mrf.mxu0
        %699 = vdwg.mxu0
        %vm700 = vcmask 261120
        %701 = vst.msk [vmem:[%s134] sm:$0xff] %vm700, %v697
        %s702 = sand.u32 %s71, 1
        %s703 = scalar_lea.sflag [#allocation3], %s702
        %s704 = sand.u32 %s71, 1
        %s705 = smul.addr %s704, 8
        %s706 = scalar_lea.vmem [#allocation2], %s705
        // Predicated region
        $region29: #{tpu_custom_call.1} parent=27 // pred_check
          %p707 = pneg %p81
        $region30: #{tpu_custom_call.1} parent=27 // pred_check_branch
          %709 = sbr.rel (%p707) target = $region32
        $region31: #{tpu_custom_call.1} parent=27 // pred_region
          %s711 = ssub.s32 128, 128
          %712 = vsyncadd %s703, %s711
          %s713 = smul.addr %s16, 128
          %s714 = scalar_lea.hbm %s2, %s713
          %s716 = sshll.u32 %s706, 4
          %s717 = int_to_ptr.vmem [resolvable:$true] %s716
          %719 = dma.vmem_to_hbm [thread:$0]  %s717, 128, %s714, %s703
        $region32: #{tpu_custom_call.1} parent=27 // pred_fallthru
          _
      $region28: #{tpu_custom_call.1} parent=5 // pred_fallthru
        _
      %p720 = scmp.le.s32.totalorder 2, %s11
      // Predicated region
      $region33: #{tpu_custom_call.1} parent=5 // pred_check
        %p721 = pneg %p720
      $region34: #{tpu_custom_call.1} parent=5 // pred_check_branch
        %723 = sbr.rel (%p721) target = $region36
      $region35: #{tpu_custom_call.1} parent=5 // pred_region
        %s724 = ssub.s32 %s11, 2
        // Predicated region
        $region37: #{tpu_custom_call.1} parent=35 // pred_check
          %p725 = pneg %p87
        $region38: #{tpu_custom_call.1} parent=35 // pred_check_branch
          %727 = sbr.rel (%p725) target = $region40
        $region39: #{tpu_custom_call.1} parent=35 // pred_region
          %s728 = sand.u32 %s72, 1
          %s729 = scalar_lea.sflag [#allocation3], %s728
          %s730 = sand.u32 %s72, 1
          %s731 = smul.addr %s730, 8
          %s732 = scalar_lea.vmem [#allocation2], %s731
          %733 = dma.done %s729, 128
        $region40: #{tpu_custom_call.1} parent=35 // pred_fallthru
          _
      $region36: #{tpu_custom_call.1} parent=5 // pred_fallthru
        _
    $region6: #{tpu_custom_call.1} parent=1 // loop_footer
      %s15 = sadd.s32 1, %s11
    $region7: #{tpu_custom_call.1} parent=1 // loop_footer_branch
      %10 = sbr.rel target = $region3
    $region8: #{tpu_custom_call.1} parent=1 // loop_exit
      _
    %734 = vsyncpa [#allocation3], 1
    %s735 = scalar_lea.sflag [#allocation3], 1
    %736 = vsyncpa %s735, 1

</llo_original>
